<compile_context>
chip_gen: v5e
topology: v5e:2x2
jax: 0.10.0
libtpu: 0.0.40
codegen_flags: <defaults>
</compile_context>

<pallas_src>
import jax
import jax.numpy as jnp
from jax.experimental import pallas as pl
from jax.experimental.pallas import tpu as pltpu

_SQRT1_2 = 0.7071067811865476  # 1/sqrt(2)

_VMEM_BLOCK_BUDGET = 2 * 1024 * 1024  # bytes per block buffer (safe on v7x/v6e/v5e)
_MAX_ROW_TILE = 1024


# ----------------------------- Pallas kernels ------------------------------ #

def _gelu_kernel(x_ref, o_ref):
    # Exact (erf-based) GELU, matching nn.GELU(approximate='none').
    x = x_ref[...].astype(jnp.float32)
    y = 0.5 * x * (1.0 + jax.lax.erf(x * _SQRT1_2))
    o_ref[...] = y.astype(o_ref.dtype)


def _relu_kernel(x_ref, o_ref):
    x = x_ref[...]
    o_ref[...] = jnp.maximum(x, 0)


def _swiglu_split_kernel(x_ref, gate_ref, o_ref):
    # out = silu(gate) * x, halves arrive as separate lane-aligned tiles.
    x = x_ref[...].astype(jnp.float32)
    g = gate_ref[...].astype(jnp.float32)
    o_ref[...] = (x * g * jax.nn.sigmoid(g)).astype(o_ref.dtype)


def _swiglu_fused_kernel(x_ref, o_ref):
    # Fallback for small / non-lane-aligned hidden: split inside the kernel.
    h = x_ref.shape[-1] // 2
    x = x_ref[:, :h].astype(jnp.float32)
    g = x_ref[:, h:].astype(jnp.float32)
    o_ref[...] = (x * g * jax.nn.sigmoid(g)).astype(o_ref.dtype)


# ------------------------------- tiling utils ------------------------------- #

def _row_tile(m: int, block_cols: int, itemsize: int) -> int:
    """Pick a row tile: multiple of 8, capped by a per-block VMEM budget."""
    if m <= 8:
        return m
    rows = _VMEM_BLOCK_BUDGET // max(1, block_cols * itemsize)
    rows = min(rows, _MAX_ROW_TILE, m)
    rows = (rows // 8) * 8
    return max(8, rows)


def _pad_rows(x2d, tm):
    m = x2d.shape[0]
    pad = (-m) % tm
    if pad:
        x2d = jnp.pad(x2d, ((0, pad), (0, 0)))
    return x2d, m


_COMPILER_PARAMS = pltpu.CompilerParams(dimension_semantics=("parallel",))


def _run_unary(kernel, x2d):
    """Row-tiled elementwise op with identical in/out shapes (GELU, ReLU)."""
    m, d = x2d.shape
    tm = _row_tile(m, d, x2d.dtype.itemsize)
    xp, m_orig = _pad_rows(x2d, tm)
    mp = xp.shape[0]
    out = pl.pallas_call(
        kernel,
        out_shape=jax.ShapeDtypeStruct((mp, d), x2d.dtype),
        grid=(mp // tm,),
        in_specs=[pl.BlockSpec((tm, d), lambda i: (i, 0))],
        out_specs=pl.BlockSpec((tm, d), lambda i: (i, 0)),
        compiler_params=_COMPILER_PARAMS,
    )(xp)
    return out if mp == m_orig else out[:m_orig]


def _run_swiglu(x2d):
    m, d = x2d.shape
    h = d // 2
    itemsize = x2d.dtype.itemsize

    if h % 128 == 0:
        # Lane-aligned halves: DMA left/right halves directly as separate tiles.
        tm = _row_tile(m, h, itemsize)
        xp, m_orig = _pad_rows(x2d, tm)
        mp = xp.shape[0]
        out = pl.pallas_call(
            _swiglu_split_kernel,
            out_shape=jax.ShapeDtypeStruct((mp, h), x2d.dtype),
            grid=(mp // tm,),
            in_specs=[
                pl.BlockSpec((tm, h), lambda i: (i, 0)),  # x (left) half
                pl.BlockSpec((tm, h), lambda i: (i, 1)),  # gate (right) half
            ],
            out_specs=pl.BlockSpec((tm, h), lambda i: (i, 0)),
            compiler_params=_COMPILER_PARAMS,
        )(xp, xp)
    else:
        # Small / unaligned hidden: keep the whole hidden dim in the block.
        tm = _row_tile(m, d, itemsize)
        xp, m_orig = _pad_rows(x2d, tm)
        mp = xp.shape[0]
        out = pl.pallas_call(
            _swiglu_fused_kernel,
            out_shape=jax.ShapeDtypeStruct((mp, h), x2d.dtype),
            grid=(mp // tm,),
            in_specs=[pl.BlockSpec((tm, d), lambda i: (i, 0))],
            out_specs=pl.BlockSpec((tm, h), lambda i: (i, 0)),
            compiler_params=_COMPILER_PARAMS,
        )(xp)
    return out if mp == m_orig else out[:m_orig]


# ------------------------- Activation "module" API -------------------------- #

class Activation:
    """JAX/Pallas analogue of OLMo's Activation base class."""

    def __call__(self, x):
        raise NotImplementedError

    @property
    def output_multiplier(self) -> float:
        raise NotImplementedError

    @classmethod
    def build(cls, activation_type: str) -> "Activation":
        if activation_type == "gelu":
            return GELU()
        elif activation_type == "relu":
            return ReLU()
        elif activation_type == "swiglu":
            return SwiGLU()
        else:
            raise NotImplementedError(f"Unknown activation: '{activation_type}'")


class GELU(Activation):
    def __call__(self, x):
        lead, d = x.shape[:-1], x.shape[-1]
        y2d = _run_unary(_gelu_kernel, x.reshape(-1, d))
        return y2d.reshape(*lead, d)

    @property
    def output_multiplier(self) -> float:
        return 1.0


class ReLU(Activation):
    def __call__(self, x):
        lead, d = x.shape[:-1], x.shape[-1]
        y2d = _run_unary(_relu_kernel, x.reshape(-1, d))
        return y2d.reshape(*lead, d)

    @property
    def output_multiplier(self) -> float:
        return 1.0


class SwiGLU(Activation):
    def __call__(self, x):
        lead, d = x.shape[:-1], x.shape[-1]
        assert d % 2 == 0, "SwiGLU requires an even last dimension"
        y2d = _run_swiglu(x.reshape(-1, d))
        return y2d.reshape(*lead, d // 2)

    @property
    def output_multiplier(self) -> float:
        return 0.5


# ----------------------------------- main ----------------------------------- #

if __name__ == "__main__":
    key = jax.random.PRNGKey(0)
    batch, seq, hidden = 2, 8, 32
    x = jax.random.normal(key, (batch, seq, hidden), dtype=jnp.float32)

    # GELU (approximate='none')
    gelu = Activation.build("gelu")
    y_gelu = jax.block_until_ready(gelu(x))
    ref_gelu = jax.nn.gelu(x, approximate=False)
    assert y_gelu.shape == (batch, seq, hidden)
    assert jnp.allclose(y_gelu, ref_gelu, atol=1e-5, rtol=1e-5)

    # ReLU
    relu = Activation.build("relu")
    y_relu = jax.block_until_ready(relu(x))
    assert y_relu.shape == (batch, seq, hidden)
    assert jnp.allclose(y_relu, jnp.maximum(x, 0.0), atol=0.0)

    # SwiGLU — small unaligned hidden (fallback path)
    swiglu = Activation.build("swiglu")
    y_swiglu = jax.block_until_ready(swiglu(x))
    xh, gate = jnp.split(x, 2, axis=-1)
    ref_swiglu = jax.nn.silu(gate) * xh
    assert y_swiglu.shape == (batch, seq, hidden // 2)
    assert int(hidden * swiglu.output_multiplier) == y_swiglu.shape[-1]
    assert jnp.allclose(y_swiglu, ref_swiglu, atol=1e-5, rtol=1e-5)

    # SwiGLU — lane-aligned hidden (optimized split-BlockSpec path)
    hidden2 = 256
    x2 = jax.random.normal(jax.random.PRNGKey(1), (batch, seq, hidden2), dtype=jnp.float32)
    y_swiglu2 = jax.block_until_ready(swiglu(x2))
    xh2, gate2 = jnp.split(x2, 2, axis=-1)
    ref_swiglu2 = jax.nn.silu(gate2) * xh2
    assert y_swiglu2.shape == (batch, seq, hidden2 // 2)
    assert jnp.allclose(y_swiglu2, ref_swiglu2, atol=1e-5, rtol=1e-5)

    print("KERNEL_OK")
</pallas_src>

<mosaic_0001>
module attributes {stable_mosaic.version = 11 : i64} {
  func.func @_gelu_kernel(%arg0: i32, %arg1: memref<16x32xf32, #tpu.memory_space<vmem>>, %arg2: memref<16x32xf32, #tpu.memory_space<vmem>>) attributes {dimension_semantics = [#tpu.dimension_semantics<parallel>], iteration_bounds = array<i64: 1>, scalar_prefetch = 0 : i64, scratch_operands = 0 : i64, tpu.core_type = #tpu.core_type<tc>, window_params = [{transform_indices = @transform_0, window_bounds = array<i64: 16, 32>}, {transform_indices = @transform_1, window_bounds = array<i64: 16, 32>}]} {
    %c0 = arith.constant 0 : index
    %c0_0 = arith.constant 0 : index
    %0 = vector.load %arg1[%c0, %c0_0] : memref<16x32xf32, #tpu.memory_space<vmem>>, vector<16x32xf32>
    %cst = arith.constant 5.000000e-01 : f32
    %1 = vector.broadcast %cst : f32 to vector<16x32xf32>
    %2 = arith.mulf %1, %0 : vector<16x32xf32>
    %cst_1 = arith.constant 0.707106769 : f32
    %3 = vector.broadcast %cst_1 : f32 to vector<16x32xf32>
    %4 = arith.mulf %0, %3 : vector<16x32xf32>
    %5 = math.erf %4 : vector<16x32xf32>
    %cst_2 = arith.constant 1.000000e+00 : f32
    %6 = vector.broadcast %cst_2 : f32 to vector<16x32xf32>
    %7 = arith.addf %6, %5 : vector<16x32xf32>
    %8 = arith.mulf %2, %7 : vector<16x32xf32>
    %c0_3 = arith.constant 0 : index
    %c0_4 = arith.constant 0 : index
    %9 = vector.load %arg2[%c0_3, %c0_4] : memref<16x32xf32, #tpu.memory_space<vmem>>, vector<16x32xf32>
    tpu.vector_store %arg2[%c0_3, %c0_4], %8 {strides = array<i32>} : memref<16x32xf32, #tpu.memory_space<vmem>>, vector<16x32xf32>,
    return
  }
  func.func @transform_0(%arg0: i32) -> (i32, i32) {
    %c0_i32 = arith.constant 0 : i32
    %c0_i32_0 = arith.constant 0 : i32
    return %arg0, %c0_i32 : i32, i32
  }
  func.func @transform_1(%arg0: i32) -> (i32, i32) {
    %c0_i32 = arith.constant 0 : i32
    %c0_i32_0 = arith.constant 0 : i32
    return %arg0, %c0_i32 : i32, i32
  }
}

</mosaic_0001>

<llo_original>
// kernel: tpu_custom_call.1
$region0: #{tpu_custom_call.1}
  #allocation0 [shape = 'u32[]', space=smem, size = 0x4, offset = 0x4, fixed_abs, tag = 'smem constant byte address 0x4 - core index']
  #allocation1 [shape = 'u32[72,128]{1,0:T(1,128)}', space=vmem, size = 0x9000, scoped, tag = 'internal scratch']
  %s0 = inlined_call_operand.hbm [shape: f32[16,32], index: 0, kind: input, shape index: {}]
  %s1 = inlined_call_operand.hbm [shape: f32[16,32], index: 1, kind: output, shape index: {}]
  %s2 = sld [smem:[#allocation0]]
  $region18: #{tpu_custom_call.1} parent=0
    _
  %s4 = ssub.s32 1, %s2
  %s5 = scalar_select 0, %s4, %s2
  $region1: #{tpu_custom_call.1} parent=0
    #allocation2 [shape = 'u8[8192]{0}', space=vmem, size = 0x2000, scoped, tag = 'input window, operand 0, single buffered']
    #allocation3 [shape = 's32[1]{0}', space=sflag, size = 0x4, scoped, tag = 'scoped memory for tpu_custom_call.1']
    #allocation4 [shape = 's32[1]{0}', space=sflag, size = 0x4, scoped, tag = 'scoped memory for tpu_custom_call.1']
    #allocation5 [shape = 'u8[8192]{0}', space=vmem, size = 0x2000, scoped, tag = 'output window, operand 0, single buffered']
    %6 = vsyncpa [#allocation3], 0
    %7 = vsyncpa [#allocation4], 0
    // Predicated region
    $region2: #{tpu_custom_call.1} parent=1 // pred_check
      _
    $region3: #{tpu_custom_call.1} parent=1 // pred_check_branch
      %9 = sbr.rel (0) target = $region5
    $region4: #{tpu_custom_call.1} parent=1 // pred_region
      %11 = vsyncadd [#allocation3], 0
      %s12 = sshll.u32 %s0, 4
      %s13 = int_to_ptr.hbm [resolvable:$true] %s12
      %s14 = sshll.u32 [#allocation2], 4
      %s15 = int_to_ptr.vmem [resolvable:$true] %s14
      %20 = dma.hbm_to_vmem [thread:$0]  %s13, 256, %s15, [#allocation3], 128, 128, 8
    $region5: #{tpu_custom_call.1} parent=1 // pred_fallthru
      _
    // Predicated region
    $region6: #{tpu_custom_call.1} parent=1 // pred_check
      _
    $region7: #{tpu_custom_call.1} parent=1 // pred_check_branch
      %22 = sbr.rel (0) target = $region9
    $region8: #{tpu_custom_call.1} parent=1 // pred_region
      %24 = dma.done [#allocation3], 256
    $region9: #{tpu_custom_call.1} parent=1 // pred_fallthru
      _
    %v25 = vld [vmem:[#allocation2] sm:$0xff]
    %v26 = vld [vmem:[#allocation2 + $0x8] sm:$0xff]
    %v27 = vmul.f32 %v25, 0.5
    %v28 = vmul.f32 %v26, 0.5
    %v29 = vmul.f32 %v25, 0.70710677
    %v30 = vmul.f32 %v26, 0.70710677
    %v31 = vmul.f32 %v29, %v29
    %v32 = vmin.f32 16.0, %v31
    %v33 = vmul.f32 %v32, 2.1237322e-06
    %v34 = vadd.f32 %v33, 0.00028619796
    %v35 = vmul.f32 %v32, %v34
    %v36 = vadd.f32 %v35, 0.0036580483
    %v37 = vmul.f32 %v32, %v36
    %v38 = vadd.f32 %v37, 0.05243302
    %v39 = vmul.f32 %v32, %v38
    %v40 = vadd.f32 %v39, 0.18741608
    %v41 = vmul.f32 %v32, %v40
    %v42 = vadd.f32 %v41, 1.1283791
    %v43 = vmul.f32 %v29, %v42
    %v44 = vmul.f32 %v32, 3.8918573e-05
    %v45 = vadd.f32 %v44, 0.001143296
    %v46 = vmul.f32 %v32, %v45
    %v47 = vadd.f32 %v46, 0.014752088
    %v48 = vmul.f32 %v32, %v47
    %v49 = vadd.f32 %v48, 0.112945676
    %v50 = vmul.f32 %v32, %v49
    %v51 = vadd.f32 %v50, 0.4994258
    %v52 = vmul.f32 %v32, %v51
    %v53 = vadd.f32 %v52, 1.0
    %v54 = vrcp.pop %v53
    %v55 = vmul.f32 %v53, %v54
    %v56 = vsub.f32 1.0, %v55
    %v57 = vmul.f32 %v54, %v56
    %v58 = vadd.f32 %v54, %v57
    %vm59 = vweird.f32 %v53
    %vm60 = vweird.f32 %v54
    %vm61 = vmor %vm59, %vm60
    %v62 = vsel %vm61, %v54, %v58
    %v63 = vand.u32 2147483647, %v53
    %vm64 = vcmp.eq.f32.partialorder %v63, 8.507059e+37
    %v65 = vand.u32 %v53, 2147483648
    %v66 = vor.u32 1.1754944e-38, %v65
    %v67 = vsel %vm64, %v66, %v62
    %v68 = vmul.f32 %v43, %v67
    %v69 = vmin.f32 %v68, 1.0
    %v70 = vmax.f32 %v69, -1.0
    %v71 = vmul.f32 %v30, %v30
    %v72 = vmin.f32 16.0, %v71
    %v73 = vmul.f32 %v72, 2.1237322e-06
    %v74 = vadd.f32 %v73, 0.00028619796
    %v75 = vmul.f32 %v72, %v74
    %v76 = vadd.f32 %v75, 0.0036580483
    %v77 = vmul.f32 %v72, %v76
    %v78 = vadd.f32 %v77, 0.05243302
    %v79 = vmul.f32 %v72, %v78
    %v80 = vadd.f32 %v79, 0.18741608
    %v81 = vmul.f32 %v72, %v80
    %v82 = vadd.f32 %v81, 1.1283791
    %v83 = vmul.f32 %v30, %v82
    %v84 = vmul.f32 %v72, 3.8918573e-05
    %v85 = vadd.f32 %v84, 0.001143296
    %v86 = vmul.f32 %v72, %v85
    %v87 = vadd.f32 %v86, 0.014752088
    %v88 = vmul.f32 %v72, %v87
    %v89 = vadd.f32 %v88, 0.112945676
    %v90 = vmul.f32 %v72, %v89
    %v91 = vadd.f32 %v90, 0.4994258
    %v92 = vmul.f32 %v72, %v91
    %v93 = vadd.f32 %v92, 1.0
    %v94 = vrcp.pop %v93
    %v95 = vmul.f32 %v93, %v94
    %v96 = vsub.f32 1.0, %v95
    %v97 = vmul.f32 %v94, %v96
    %v98 = vadd.f32 %v94, %v97
    %vm99 = vweird.f32 %v93
    %vm100 = vweird.f32 %v94
    %vm101 = vmor %vm99, %vm100
    %v102 = vsel %vm101, %v94, %v98
    %v103 = vand.u32 2147483647, %v93
    %vm104 = vcmp.eq.f32.partialorder %v103, 8.507059e+37
    %v105 = vand.u32 %v93, 2147483648
    %v106 = vor.u32 1.1754944e-38, %v105
    %v107 = vsel %vm104, %v106, %v102
    %v108 = vmul.f32 %v83, %v107
    %v109 = vmin.f32 %v108, 1.0
    %v110 = vmax.f32 %v109, -1.0
    %v111 = vadd.f32 %v70, 1.0
    %v112 = vadd.f32 %v110, 1.0
    %v113 = vmul.f32 %v27, %v111
    %v114 = vmul.f32 %v28, %v112
    %vm115 = vcmask 261120
    %116 = vst.msk [vmem:[#allocation5] sm:$0xff] %vm115, %v113
    %117 = vst.msk [vmem:[#allocation5 + $0x8] sm:$0xff] %vm115, %v114
    // Predicated region
    $region10: #{tpu_custom_call.1} parent=1 // pred_check
      _
    $region11: #{tpu_custom_call.1} parent=1 // pred_check_branch
      %119 = sbr.rel (0) target = $region13
    $region12: #{tpu_custom_call.1} parent=1 // pred_region
      %121 = vsyncadd [#allocation4], 0
      %s122 = sshll.u32 [#allocation5], 4
      %s123 = int_to_ptr.vmem [resolvable:$true] %s122
      %s124 = sshll.u32 %s1, 4
      %s125 = int_to_ptr.hbm [resolvable:$true] %s124
      %130 = dma.vmem_to_hbm [thread:$0]  %s123, 256, %s125, [#allocation4], 128, 128, 8
    $region13: #{tpu_custom_call.1} parent=1 // pred_fallthru
      _
    // Predicated region
    $region14: #{tpu_custom_call.1} parent=1 // pred_check
      _
    $region15: #{tpu_custom_call.1} parent=1 // pred_check_branch
      %132 = sbr.rel (0) target = $region17
    $region16: #{tpu_custom_call.1} parent=1 // pred_region
      %134 = dma.done [#allocation4], 256
    $region17: #{tpu_custom_call.1} parent=1 // pred_fallthru
      _
    %135 = vsyncpa [#allocation3], 1
    %136 = vsyncpa [#allocation4], 1

</llo_original>
